<compile_context>
chip_gen: v6e
topology: v6e:2x2x1
jax: 0.10.0
libtpu: 0.0.40
codegen_flags: <defaults>
</compile_context>

<pallas_src>
import functools

import numpy as np
import jax
import jax.numpy as jnp
from jax.experimental import pallas as pl
from jax.experimental.pallas import tpu as pltpu


_LANE = 128
_SUBLANE = 8


def _round_up(a, b):
    return ((a + b - 1) // b) * b


def _physical_vmem_bytes():
    """Per-core VMEM capacity; conservative default if the query fails."""
    try:
        info = pltpu.get_tpu_info()
        for name in ("vmem_capacity_bytes", "vmem_size_bytes", "vmem_bytes"):
            v = getattr(info, name, None)
            if v:
                return int(v)
    except Exception:
        pass
    return 64 * 1024 * 1024  # v7x per-TC size; safe lower bound for v5e/v6e


# ---------------------------------------------------------------------------
# Kernels
# ---------------------------------------------------------------------------

def _slice_kernel(x_ref, o_ref, *, start, width):
    # Contiguous column selection: a static lane slice of the row tile.
    o_ref[...] = x_ref[:, start:start + width]


def _gather_kernel(blk_ref, x_ref, oh_ref, o_ref, *, precision):
    # blk_ref : (n_blk,) scalar-prefetch block ids (consumed by the index_maps)
    # x_ref   : (tn, BW)  row tile of one touched feature block
    # oh_ref  : (BW, Kp)  one-hot selection matrix for that feature block
    # o_ref   : (tn, Kp)  lane-dense output tile, resident across the block axis
    del blk_ref
    j = pl.program_id(1)

    @pl.when(j == 0)
    def _():
        o_ref[...] = jnp.zeros_like(o_ref)

    x = x_ref[...]
    if x.dtype != oh_ref.dtype:
        x = x.astype(oh_ref.dtype)
    contrib = jnp.dot(
        x, oh_ref[...],
        preferred_element_type=jnp.float32,
        precision=precision,
    )
    # Each selected column receives its value from exactly one feature block
    # and exact zeros from every other block, so accumulating directly into
    # o_ref's dtype is exact (0 + v == v).
    o_ref[...] += contrib.astype(o_ref.dtype)


# ---------------------------------------------------------------------------
# Module
# ---------------------------------------------------------------------------

class ArrayFeatureExtractor:
    """JAX/Pallas port of hummingbird's ArrayFeatureExtractor (forward only)."""

    def __init__(self, column_indices):
        cols = [int(c) for c in column_indices]
        if not cols:
            raise ValueError("column_indices must be non-empty")
        self.column_indices = tuple(cols)
        self.min = min(cols)
        self.max = max(cols) + 1  # exclusive upper bound
        # Stricter than the torch module's `max-min+1 == len` test: unsorted or
        # duplicated lists must keep index_select ordering, so only a sorted,
        # duplicate-free run of consecutive ids takes the slice path.
        self.is_contiguous = (
            self.column_indices == tuple(range(self.min, self.max)))
        self._onehot_cache = {}

        phys = _physical_vmem_bytes()
        # ~40% of physical VMEM for the per-step working set (v5e/v6e ~51 MiB,
        # v7x ~25 MiB); scoped limit leaves headroom above it.
        self._budget = max(phys * 2 // 5, 16 << 20)
        self._vmem_limit = min(
            max(phys * 3 // 4, self._budget + (8 << 20)),
            phys - (4 << 20),
        )

    # ---- tiling helpers ----------------------------------------------------

    def _pick_row_tile(self, N, per_row_bytes, fixed_bytes):
        rows8 = _round_up(N, _SUBLANE)
        tn = _SUBLANE
        for cand in (4096, 2048, 1024, 512, 256, 128, 64, 32, 16, 8):
            if fixed_bytes + cand * per_row_bytes <= self._budget:
                tn = cand
                break
        tn = min(tn, rows8)
        # v7x has two TensorCores: keep >= 2 grid steps on the parallel axis
        # whenever there is enough work to split.
        if rows8 >= 2 * _SUBLANE and _round_up(N, tn) // tn < 2:
            tn = _round_up((rows8 + 1) // 2, _SUBLANE)
        return tn

    def _onehot(self, blocks, bw, kp, dtype):
        key = (tuple(blocks), bw, kp, jnp.dtype(dtype).name)
        cached = self._onehot_cache.get(key)
        if cached is not None:
            return cached
        blk_pos = {b: i for i, b in enumerate(blocks)}
        oh = np.zeros((len(blocks) * bw, kp), dtype=np.float32)
        for k, c in enumerate(self.column_indices):
            row = blk_pos[c // bw] * bw + (c % bw)
            oh[row, k] = 1.0
        arr = jnp.asarray(oh, dtype=dtype)   # 0/1 cast exactly to bf16/f32
        self._onehot_cache[key] = arr
        return arr

    # ---- forward -----------------------------------------------------------

    def __call__(self, x):
        if x.ndim != 2:
            raise ValueError("expected 2-D input (batch, features)")
        N, F = x.shape
        K = len(self.column_indices)
        if self.max > F:
            raise ValueError("column index out of range")
        Kp = _round_up(K, _LANE)
        itemsize = jnp.dtype(x.dtype).itemsize
        if self.is_contiguous:
            return self._forward_slice(x, N, F, K, Kp, itemsize)
        return self._forward_gather(x, N, F, K, Kp, itemsize)

    # contiguous: static lane slice -------------------------------------------

    def _forward_slice(self, x, N, F, K, Kp, itemsize):
        # Feature DMA window [0, W): trim to the lane block containing max_col
        # when F itself is lane aligned (BlockSpec last-dim rule).
        W = min(_round_up(self.max, _LANE), F) if F % _LANE == 0 else F

        # Output width: lane-dense Kp when padding is moderate and the padded
        # slice still fits the window (shift start if needed); otherwise exact
        # K (masked stores beat huge write amplification for tiny K).
        if K % _LANE == 0:
            out_w, start, col_off = K, self.min, 0
        elif Kp <= 2 * K and W >= Kp:
            start = self.min if self.min + Kp <= W else W - Kp
            out_w, col_off = Kp, self.min - start
        else:
            out_w, start, col_off = K, self.min, 0

        per_row = 2 * W * itemsize + 2 * out_w * itemsize
        tn = self._pick_row_tile(N, per_row, 0)
        Np = _round_up(N, tn)
        xp = x if Np == N else jnp.pad(x, ((0, Np - N), (0, 0)))

        est = tn * per_row
        cparams = pltpu.CompilerParams(
            dimension_semantics=("parallel",),
            vmem_limit_bytes=int(max(self._vmem_limit, est + (4 << 20))),
        )
        kernel = functools.partial(_slice_kernel, start=start, width=out_w)
        out = pl.pallas_call(
            kernel,
            out_shape=jax.ShapeDtypeStruct((Np, out_w), x.dtype),
            grid=(Np // tn,),
            in_specs=[pl.BlockSpec((tn, W), lambda i: (i, 0))],
            out_specs=pl.BlockSpec((tn, out_w), lambda i: (i, 0)),
            compiler_params=cparams,
        )(xp)
        if Np != N or out_w != K or col_off != 0:
            out = out[:N, col_off:col_off + K]
        return out

    # non-contiguous: one-hot MXU gather over touched feature blocks ----------

    def _forward_gather(self, x, N, F, K, Kp, itemsize):
        # Dtype-aware MXU precision: bf16 stays bf16 (native MXU, exact for a
        # 0/1 one-hot); everything else goes through f32 at HIGHEST precision.
        # TODO(synk): int32/int64 with |value| >= 2^24 need a select/DMA gather
        # to be bit exact; the MXU path rounds them.
        # TODO(synk): Precision.HIGH (bf16x3) should also be exact for a 0/1
        # one-hot and is ~2x cheaper than HIGHEST; validate before switching.
        if x.dtype == jnp.bfloat16:
            mm_dtype, precision = jnp.bfloat16, None
        else:
            mm_dtype, precision = jnp.float32, jax.lax.Precision.HIGHEST

        # Feature-block trimming: only DMA (and matmul) the 128-wide column
        # blocks that contain a selected column. Requires F % 128 == 0 so every
        # addressed block is complete; else fall back to one full-width window.
        # TODO(synk): a wrapper-side pad/pre-slice could enable block trimming
        # for very wide feature matrices with F % 128 != 0.
        if F % _LANE == 0:
            blocks = sorted({c // _LANE for c in self.column_indices})
            BW = _LANE
        else:
            blocks = [0]
            BW = F
        n_blk = len(blocks)

        oh_item = jnp.dtype(mm_dtype).itemsize
        onehot = self._onehot(blocks, BW, Kp, mm_dtype)
        blk_ids = jnp.asarray(np.asarray(blocks, dtype=np.int32))

        fixed = 2 * BW * Kp * oh_item                      # double-buffered one-hot block
        per_row = 2 * BW * itemsize + 2 * Kp * itemsize    # x tile + output tile
        tn = self._pick_row_tile(N, per_row, fixed)
        Np = _round_up(N, tn)
        xp = x if Np == N else jnp.pad(x, ((0, Np - N), (0, 0)))

        est = fixed + tn * per_row
        cparams = pltpu.CompilerParams(
            dimension_semantics=("parallel", "arbitrary"),
            vmem_limit_bytes=int(max(self._vmem_limit, est + (4 << 20))),
        )
        kernel = functools.partial(_gather_kernel, precision=precision)
        out = pl.pallas_call(
            kernel,
            out_shape=jax.ShapeDtypeStruct((Np, Kp), x.dtype),
            grid_spec=pltpu.PrefetchScalarGridSpec(
                num_scalar_prefetch=1,
                grid=(Np // tn, n_blk),
                in_specs=[
                    pl.BlockSpec((tn, BW), lambda i, j, blk: (i, blk[j])),
                    pl.BlockSpec((BW, Kp), lambda i, j, blk: (j, 0)),
                ],
                out_specs=pl.BlockSpec((tn, Kp), lambda i, j, blk: (i, 0)),
            ),
            compiler_params=cparams,
        )(blk_ids, xp, onehot)
        if Np != N or Kp != K:
            out = out[:N, :K]
        return out


if __name__ == "__main__":
    key = jax.random.PRNGKey(0)

    # 1) Non-contiguous gather, narrow features (full-window fallback path).
    x = jax.random.normal(key, (8, 16), dtype=jnp.float32)
    cols = [0, 3, 7, 4, 12]
    y = ArrayFeatureExtractor(cols)(x)
    jax.block_until_ready(y)
    ref = x[:, jnp.asarray(cols)]
    assert y.shape == ref.shape and jnp.allclose(y, ref), "gather (narrow F) mismatch"

    # 2) Contiguous sorted indices -> static lane-slice kernel.
    y_c = ArrayFeatureExtractor([2, 3, 4, 5])(x)
    jax.block_until_ready(y_c)
    assert jnp.allclose(y_c, x[:, 2:6]), "contiguous slice mismatch"

    # 3) Unsorted index list: must keep index_select order (gather path).
    cols_u = [3, 2, 4]
    y_u = ArrayFeatureExtractor(cols_u)(x)
    jax.block_until_ready(y_u)
    assert jnp.allclose(y_u, x[:, jnp.asarray(cols_u)]), "unsorted gather mismatch"

    # 4) F % 128 == 0, awkward batch: block-trimmed gather + row padding.
    x2 = jax.random.normal(jax.random.PRNGKey(1), (10, 256), dtype=jnp.float32)
    cols2 = [5, 130, 7, 64, 2, 200]
    y2 = ArrayFeatureExtractor(cols2)(x2)
    jax.block_until_ready(y2)
    ref2 = x2[:, jnp.asarray(cols2)]
    assert y2.shape == ref2.shape and jnp.allclose(y2, ref2), "block gather mismatch"

    # 5) bf16 input: native bf16 MXU gather (exact for a 0/1 one-hot).
    x3 = jax.random.normal(jax.random.PRNGKey(2), (16, 256),
                           dtype=jnp.float32).astype(jnp.bfloat16)
    cols3 = [1, 200, 130, 7]
    y3 = ArrayFeatureExtractor(cols3)(x3)
    jax.block_until_ready(y3)
    ref3 = x3[:, jnp.asarray(cols3)]
    assert y3.shape == ref3.shape and jnp.allclose(
        y3.astype(jnp.float32), ref3.astype(jnp.float32)), "bf16 gather mismatch"

    print("KERNEL_OK")
</pallas_src>

<mosaic_0001>
module attributes {stable_mosaic.version = 11 : i64} {
  func.func @_gather_kernel(%arg0: i32, %arg1: i32, %arg2: memref<1xi32, #tpu.memory_space<smem>>, %arg3: memref<8x16xf32, #tpu.memory_space<vmem>>, %arg4: memref<16x128xf32, #tpu.memory_space<vmem>>, %arg5: memref<8x128xf32, #tpu.memory_space<vmem>>) attributes {dimension_semantics = [#tpu.dimension_semantics<parallel>, #tpu.dimension_semantics<arbitrary>], iteration_bounds = array<i64: 1, 1>, scalar_prefetch = 1 : i64, scratch_operands = 0 : i64, tpu.core_type = #tpu.core_type<tc>, window_params = [{transform_indices = @transform_0, window_bounds = array<i64: 8, 16>}, {transform_indices = @transform_1, window_bounds = array<i64: 16, 128>}, {transform_indices = @transform_2, window_bounds = array<i64: 8, 128>}]} {
    %c0_i32 = arith.constant 0 : i32
    %0 = arith.cmpi eq, %arg1, %c0_i32 : i32
    %1 = arith.extui %0 : i1 to i32
    %c0_i32_0 = arith.constant 0 : i32
    %2 = arith.cmpi ne, %1, %c0_i32_0 : i32
    scf.if %2 {
      %cst_8 = arith.constant 0.000000e+00 : f32
      %9 = vector.broadcast %cst_8 : f32 to vector<8x128xf32>
      %c0_9 = arith.constant 0 : index
      %c0_10 = arith.constant 0 : index
      %10 = vector.load %arg5[%c0_9, %c0_10] : memref<8x128xf32, #tpu.memory_space<vmem>>, vector<8x128xf32>
      tpu.vector_store %arg5[%c0_9, %c0_10], %9 {strides = array<i32>} : memref<8x128xf32, #tpu.memory_space<vmem>>, vector<8x128xf32>,
    } else {
    }
    %c0 = arith.constant 0 : index
    %c0_1 = arith.constant 0 : index
    %3 = vector.load %arg3[%c0, %c0_1] : memref<8x16xf32, #tpu.memory_space<vmem>>, vector<8x16xf32>
    %c0_2 = arith.constant 0 : index
    %c0_3 = arith.constant 0 : index
    %4 = vector.load %arg4[%c0_2, %c0_3] : memref<16x128xf32, #tpu.memory_space<vmem>>, vector<16x128xf32>
    %cst = arith.constant dense<0.000000e+00> : vector<8x128xf32>
    %5 = tpu.matmul %3, %4, %cst {dimension_numbers = #tpu.dot_dimension_numbers<[1], [0], [0], [1], [0, 0, 1, 1], [], []>, precision = #tpu.contract_precision<fp32>} : vector<8x16xf32>, vector<16x128xf32>, vector<8x128xf32> -> vector<8x128xf32>
    %c0_4 = arith.constant 0 : index
    %c0_5 = arith.constant 0 : index
    %6 = vector.load %arg5[%c0_4, %c0_5] : memref<8x128xf32, #tpu.memory_space<vmem>>, vector<8x128xf32>
    %7 = arith.addf %6, %5 : vector<8x128xf32>
    %c0_6 = arith.constant 0 : index
    %c0_7 = arith.constant 0 : index
    %8 = vector.load %arg5[%c0_6, %c0_7] : memref<8x128xf32, #tpu.memory_space<vmem>>, vector<8x128xf32>
    tpu.vector_store %arg5[%c0_6, %c0_7], %7 {strides = array<i32>} : memref<8x128xf32, #tpu.memory_space<vmem>>, vector<8x128xf32>,
    return
  }
  func.func @transform_0(%arg0: i32, %arg1: i32, %arg2: memref<1xi32, #tpu.memory_space<smem>>) -> (i32, i32) {
    %0 = arith.index_cast %arg1 : i32 to index
    %1 = memref.load %arg2[%0] : memref<1xi32, #tpu.memory_space<smem>>
    %c0_i32 = arith.constant 0 : i32
    return %arg0, %1 : i32, i32
  }
  func.func @transform_1(%arg0: i32, %arg1: i32, %arg2: memref<1xi32, #tpu.memory_space<smem>>) -> (i32, i32) {
    %c0_i32 = arith.constant 0 : i32
    %c0_i32_0 = arith.constant 0 : i32
    return %arg1, %c0_i32 : i32, i32
  }
  func.func @transform_2(%arg0: i32, %arg1: i32, %arg2: memref<1xi32, #tpu.memory_space<smem>>) -> (i32, i32) {
    %c0_i32 = arith.constant 0 : i32
    %c0_i32_0 = arith.constant 0 : i32
    return %arg0, %c0_i32 : i32, i32
  }
}

</mosaic_0001>

<llo_original>
// kernel: tpu_custom_call.1
$region0: #{tpu_custom_call.1}
  #allocation0 [shape = 'u32[]', space=smem, size = 0x4, offset = 0x4, fixed_abs, tag = 'smem constant byte address 0x4 - core index']
  #allocation1 [shape = 'u32[144,128]{1,0:T(1,128)}', space=vmem, size = 0x12000, scoped, tag = 'internal scratch']
  #allocation2 [shape = 's32[1]{0}', space=sflag, size = 0x4, scoped, tag = 'scoped memory for tpu_custom_call.1']
  #allocation3 [shape = 's32[1]{0:T(128)S(6)}', space=smem, size = 0x200, scoped, tag = 'prefetched SMEM operand 0']
  %s0 = inlined_call_operand.<no memory space> [shape: s32[1], index: 0, kind: input, shape index: {}]
  %s1 = inlined_call_operand.hbm [shape: f32[8,16], index: 1, kind: input, shape index: {}]
  %s2 = inlined_call_operand.hbm [shape: f32[16,128], index: 2, kind: input, shape index: {}]
  %s3 = inlined_call_operand.hbm [shape: f32[8,128], index: 3, kind: output, shape index: {}]
  %s4 = sld [smem:[#allocation0]]
  $region30: #{tpu_custom_call.1} parent=0
    _
  %s6 = ssub.s32 1, %s4
  %s7 = scalar_select 0, %s6, %s4
  %8 = sst [smem:[#allocation3]] %s0
  $region1: #{tpu_custom_call.1} parent=0
    #allocation4 [shape = 'u8[4096]{0}', space=vmem, size = 0x1000, scoped, tag = 'input window, operand 1, single buffered']
    #allocation5 [shape = 's32[1]{0}', space=sflag, size = 0x4, scoped, tag = 'scoped memory for tpu_custom_call.1']
    #allocation6 [shape = 's32[1]{0}', space=sflag, size = 0x4, scoped, tag = 'scoped memory for tpu_custom_call.1']
    #allocation7 [shape = 'u8[8192]{0}', space=vmem, size = 0x2000, scoped, tag = 'input window, operand 2, single buffered']
    #allocation8 [shape = 's32[1]{0}', space=sflag, size = 0x4, scoped, tag = 'scoped memory for tpu_custom_call.1']
    #allocation9 [shape = 'u8[4096]{0}', space=vmem, size = 0x1000, scoped, tag = 'output window, operand 0, single buffered']
    %9 = vsyncpa [#allocation5], 0
    %10 = vsyncpa [#allocation8], 0
    %11 = vsyncpa [#allocation6], 0
    // Predicated region
    $region2: #{tpu_custom_call.1} parent=1 // pred_check
      _
    $region3: #{tpu_custom_call.1} parent=1 // pred_check_branch
      %13 = sbr.rel (0) target = $region5
    $region4: #{tpu_custom_call.1} parent=1 // pred_region
      %s14 = sld [smem:[#allocation3]]
      %s16 = ssub.s32 128, 128
      %17 = vsyncadd [#allocation5], %s16
      %s18 = smul.addr %s14, 128
      %s19 = scalar_lea.hbm %s1, %s18
      %s21 = sshll.u32 [#allocation4], 4
      %s22 = int_to_ptr.vmem [resolvable:$true] %s21
      %24 = dma.hbm_to_vmem [thread:$0]  %s19, 128, %s22, [#allocation5]
    $region5: #{tpu_custom_call.1} parent=1 // pred_fallthru
      _
    // Predicated region
    $region6: #{tpu_custom_call.1} parent=1 // pred_check
      _
    $region7: #{tpu_custom_call.1} parent=1 // pred_check_branch
      %26 = sbr.rel (0) target = $region9
    $region8: #{tpu_custom_call.1} parent=1 // pred_region
      %s28 = ssub.s32 256, 256
      %29 = vsyncadd [#allocation8], %s28
      %s30 = sshll.u32 [#allocation7], 4
      %s31 = int_to_ptr.vmem [resolvable:$true] %s30
      %36 = dma.hbm_to_vmem [thread:$0]  %s2, 256, %s31, [#allocation8], 128, 128, 8
    $region9: #{tpu_custom_call.1} parent=1 // pred_fallthru
      _
    // Predicated region
    $region10: #{tpu_custom_call.1} parent=1 // pred_check
      _
    $region11: #{tpu_custom_call.1} parent=1 // pred_check_branch
      %38 = sbr.rel (0) target = $region13
    $region12: #{tpu_custom_call.1} parent=1 // pred_region
      %39 = dma.done [#allocation5], 128
    $region13: #{tpu_custom_call.1} parent=1 // pred_fallthru
      _
    // Predicated region
    $region14: #{tpu_custom_call.1} parent=1 // pred_check
      _
    $region15: #{tpu_custom_call.1} parent=1 // pred_check_branch
      %41 = sbr.rel (0) target = $region17
    $region16: #{tpu_custom_call.1} parent=1 // pred_region
      %42 = dma.done [#allocation8], 256
    $region17: #{tpu_custom_call.1} parent=1 // pred_fallthru
      _
    %s43 = sld [smem:[#allocation3]]
    %p44 = scmp.eq.s32.totalorder 0, 0
    // Predicated region
    $region18: #{tpu_custom_call.1} parent=1 // pred_check
      %p45 = pneg %p44
    $region19: #{tpu_custom_call.1} parent=1 // pred_check_branch
      %47 = sbr.rel (%p45) target = $region21
    $region20: #{tpu_custom_call.1} parent=1 // pred_region
      %48 = vst [vmem:[#allocation9] sm:$0xff] 0.0
    $region21: #{tpu_custom_call.1} parent=1 // pred_fallthru
      _
    %v49 = vld [vmem:[#allocation4] sm:$0xff]
    %v50 = vld [vmem:[#allocation7] sm:$0xff]
    %v51 = vld [vmem:[#allocation7 + $0x8] sm:$0xff]
    %vm52 = vcmask 130048
    %v54 = vsel %vm52, %v49, 0
    %56 = vmatprep.subr.mxu0 0.0
    %57 = vmatpush1.msra.mxu0 0.0
    %58 = vmatprep.subr.mxu0 0.0
    %59 = vmatpush1.msra.mxu0 0.0
    %60 = vmatprep.subr.mxu0 0.0
    %61 = vmatpush1.msra.mxu0 0.0
    %62 = vmatprep.subr.mxu0 0.0
    %63 = vmatpush1.msra.mxu0 0.0
    %64 = vmatprep.subr.mxu0 0.0
    %65 = vmatpush1.msra.mxu0 0.0
    %66 = vmatprep.subr.mxu0 0.0
    %67 = vmatpush1.msra.mxu0 0.0
    %68 = vmatprep.subr.mxu0 0.0
    %69 = vmatpush1.msra.mxu0 0.0
    %70 = vmatprep.subr.mxu0 0.0
    %71 = vmatpush1.msra.mxu0 0.0
    %72 = vmatprep.subr.mxu0 0.0
    %73 = vmatpush1.msra.mxu0 0.0
    %74 = vmatprep.subr.mxu0 0.0
    %75 = vmatpush1.msra.mxu0 0.0
    %76 = vmatprep.subr.mxu0 0.0
    %77 = vmatpush1.msra.mxu0 0.0
    %78 = vmatprep.subr.mxu0 0.0
    %79 = vmatpush1.msra.mxu0 0.0
    %80 = vmatprep.subr.mxu0 0.0
    %81 = vmatpush1.msra.mxu0 0.0
    %82 = vmatprep.subr.mxu0 0.0
    %83 = vmatpush1.msra.mxu0 0.0
    %84 = vmatprep.subr.mxu0 0.0
    %v85 = vand.u32 %v51, 4294901760
    %86 = vmatpush1.msra.mxu0 %v85
    %87 = vmatprep.subr.mxu0 0.0
    %v88 = vand.u32 %v50, 4294901760
    %89 = vmatpush1.msra.mxu0 %v88
    %90 = vmatprep.subr.mxu0 0.0
    %91 = vmatpush2.msra.mxu0 0.0
    %92 = vmatprep.subr.mxu0 0.0
    %93 = vmatpush2.msra.mxu0 0.0
    %94 = vmatprep.subr.mxu0 0.0
    %95 = vmatpush2.msra.mxu0 0.0
    %96 = vmatprep.subr.mxu0 0.0
    %97 = vmatpush2.msra.mxu0 0.0
    %98 = vmatprep.subr.mxu0 0.0
    %99 = vmatpush2.msra.mxu0 0.0
    %100 = vmatprep.subr.mxu0 0.0
    %101 = vmatpush2.msra.mxu0 0.0
    %102 = vmatprep.subr.mxu0 0.0
    %103 = vmatpush2.msra.mxu0 0.0
    %104 = vmatprep.subr.mxu0 0.0
    %105 = vmatpush2.msra.mxu0 0.0
    %106 = vmatprep.subr.mxu0 0.0
    %107 = vmatpush2.msra.mxu0 0.0
    %108 = vmatprep.subr.mxu0 0.0
    %109 = vmatpush2.msra.mxu0 0.0
    %110 = vmatprep.subr.mxu0 0.0
    %111 = vmatpush2.msra.mxu0 0.0
    %112 = vmatprep.subr.mxu0 0.0
    %113 = vmatpush2.msra.mxu0 0.0
    %114 = vmatprep.subr.mxu0 0.0
    %115 = vmatpush2.msra.mxu0 0.0
    %116 = vmatprep.subr.mxu0 0.0
    %117 = vmatpush2.msra.mxu0 0.0
    %118 = vmatprep.subr.mxu0 0.0
    %119 = vmatpush2.msra.mxu0 0.0
    %120 = vmatprep.subr.mxu0 0.0
    %121 = vmatpush2.msra.mxu0 0.0
    %122 = vmatprep.mubr.f32.mxu0 0.0
    %v123 = vand.u32 %v54, 4294901760
    %v124 = vsub.f32 %v54, %v123
    %v125 = vand.u32 %v124, 4294901760
    %v126 = vsub.f32 %v124, %v125
    %v127 = vand.u32 %v126, 4294901760
    %128 = vmatmul.mubr.f32.gmra.mxu0 %v127
    %v129 = vpop.f32.mrf.mxu0
    %v130 = vadd.f32 0.0, %v129
    %v131 = vpop.f32.mrf.mxu0
    %132 = vdwg.mxu0
    %133 = vmatprep.subr.mxu0 0.0
    %134 = vmatpush1.msra.mxu0 0.0
    %135 = vmatprep.subr.mxu0 0.0
    %136 = vmatpush1.msra.mxu0 0.0
    %137 = vmatprep.subr.mxu0 0.0
    %138 = vmatpush1.msra.mxu0 0.0
    %139 = vmatprep.subr.mxu0 0.0
    %140 = vmatpush1.msra.mxu0 0.0
    %141 = vmatprep.subr.mxu0 0.0
    %142 = vmatpush1.msra.mxu0 0.0
    %143 = vmatprep.subr.mxu0 0.0
    %144 = vmatpush1.msra.mxu0 0.0
    %145 = vmatprep.subr.mxu0 0.0
    %146 = vmatpush1.msra.mxu0 0.0
    %147 = vmatprep.subr.mxu0 0.0
    %148 = vmatpush1.msra.mxu0 0.0
    %149 = vmatprep.subr.mxu0 0.0
    %150 = vmatpush1.msra.mxu0 0.0
    %151 = vmatprep.subr.mxu0 0.0
    %152 = vmatpush1.msra.mxu0 0.0
    %153 = vmatprep.subr.mxu0 0.0
    %154 = vmatpush1.msra.mxu0 0.0
    %155 = vmatprep.subr.mxu0 0.0
    %156 = vmatpush1.msra.mxu0 0.0
    %157 = vmatprep.subr.mxu0 0.0
    %158 = vmatpush1.msra.mxu0 0.0
    %159 = vmatprep.subr.mxu0 0.0
    %160 = vmatpush1.msra.mxu0 0.0
    %161 = vmatprep.subr.mxu0 0.0
    %v162 = vand.u32 %v51, 4294901760
    %v163 = vsub.f32 %v51, %v162
    %v164 = vand.u32 %v163, 4294901760
    %v165 = vsub.f32 %v163, %v164
    %v166 = vand.u32 %v165, 4294901760
    %167 = vmatpush1.msra.mxu0 %v166
    %168 = vmatprep.subr.mxu0 0.0
    %v169 = vand.u32 %v50, 4294901760
    %v170 = vsub.f32 %v50, %v169
    %v171 = vand.u32 %v170, 4294901760
    %v172 = vsub.f32 %v170, %v171
    %v173 = vand.u32 %v172, 4294901760
    %174 = vmatpush1.msra.mxu0 %v173
    %175 = vmatprep.subr.mxu0 0.0
    %176 = vmatpush2.msra.mxu0 0.0
    %177 = vmatprep.subr.mxu0 0.0
    %178 = vmatpush2.msra.mxu0 0.0
    %179 = vmatprep.subr.mxu0 0.0
    %180 = vmatpush2.msra.mxu0 0.0
    %181 = vmatprep.subr.mxu0 0.0
    %182 = vmatpush2.msra.mxu0 0.0
    %183 = vmatprep.subr.mxu0 0.0
    %184 = vmatpush2.msra.mxu0 0.0
    %185 = vmatprep.subr.mxu0 0.0
    %186 = vmatpush2.msra.mxu0 0.0
    %187 = vmatprep.subr.mxu0 0.0
    %188 = vmatpush2.msra.mxu0 0.0
    %189 = vmatprep.subr.mxu0 0.0
    %190 = vmatpush2.msra.mxu0 0.0
    %191 = vmatprep.subr.mxu0 0.0
    %192 = vmatpush2.msra.mxu0 0.0
    %193 = vmatprep.subr.mxu0 0.0
    %194 = vmatpush2.msra.mxu0 0.0
    %195 = vmatprep.subr.mxu0 0.0
    %196 = vmatpush2.msra.mxu0 0.0
    %197 = vmatprep.subr.mxu0 0.0
    %198 = vmatpush2.msra.mxu0 0.0
    %199 = vmatprep.subr.mxu0 0.0
    %200 = vmatpush2.msra.mxu0 0.0
    %201 = vmatprep.subr.mxu0 0.0
    %202 = vmatpush2.msra.mxu0 0.0
    %203 = vmatprep.subr.mxu0 0.0
    %204 = vmatpush2.msra.mxu0 0.0
    %205 = vmatprep.subr.mxu0 0.0
    %206 = vmatpush2.msra.mxu0 0.0
    %207 = vmatprep.mubr.f32.mxu0 0.0
    %v208 = vand.u32 %v54, 4294901760
    %209 = vmatmul.mubr.f32.gmra.mxu0 %v208
    %v210 = vpop.f32.mrf.mxu0
    %v211 = vadd.f32 %v130, %v210
    %v212 = vpop.f32.mrf.mxu0
    %213 = vdwg.mxu0
    %214 = vmatprep.subr.mxu0 0.0
    %215 = vmatpush1.msra.mxu0 0.0
    %216 = vmatprep.subr.mxu0 0.0
    %217 = vmatpush1.msra.mxu0 0.0
    %218 = vmatprep.subr.mxu0 0.0
    %219 = vmatpush1.msra.mxu0 0.0
    %220 = vmatprep.subr.mxu0 0.0
    %221 = vmatpush1.msra.mxu0 0.0
    %222 = vmatprep.subr.mxu0 0.0
    %223 = vmatpush1.msra.mxu0 0.0
    %224 = vmatprep.subr.mxu0 0.0
    %225 = vmatpush1.msra.mxu0 0.0
    %226 = vmatprep.subr.mxu0 0.0
    %227 = vmatpush1.msra.mxu0 0.0
    %228 = vmatprep.subr.mxu0 0.0
    %229 = vmatpush1.msra.mxu0 0.0
    %230 = vmatprep.subr.mxu0 0.0
    %231 = vmatpush1.msra.mxu0 0.0
    %232 = vmatprep.subr.mxu0 0.0
    %233 = vmatpush1.msra.mxu0 0.0
    %234 = vmatprep.subr.mxu0 0.0
    %235 = vmatpush1.msra.mxu0 0.0
    %236 = vmatprep.subr.mxu0 0.0
    %237 = vmatpush1.msra.mxu0 0.0
    %238 = vmatprep.subr.mxu0 0.0
    %239 = vmatpush1.msra.mxu0 0.0
    %240 = vmatprep.subr.mxu0 0.0
    %241 = vmatpush1.msra.mxu0 0.0
    %242 = vmatprep.subr.mxu0 0.0
    %v243 = vand.u32 %v51, 4294901760
    %v244 = vsub.f32 %v51, %v243
    %245 = vmatpush1.msra.mxu0 %v244
    %246 = vmatprep.subr.mxu0 0.0
    %v247 = vand.u32 %v50, 4294901760
    %v248 = vsub.f32 %v50, %v247
    %249 = vmatpush1.msra.mxu0 %v248
    %250 = vmatprep.subr.mxu0 0.0
    %251 = vmatpush2.msra.mxu0 0.0
    %252 = vmatprep.subr.mxu0 0.0
    %253 = vmatpush2.msra.mxu0 0.0
    %254 = vmatprep.subr.mxu0 0.0
    %255 = vmatpush2.msra.mxu0 0.0
    %256 = vmatprep.subr.mxu0 0.0
    %257 = vmatpush2.msra.mxu0 0.0
    %258 = vmatprep.subr.mxu0 0.0
    %259 = vmatpush2.msra.mxu0 0.0
    %260 = vmatprep.subr.mxu0 0.0
    %261 = vmatpush2.msra.mxu0 0.0
    %262 = vmatprep.subr.mxu0 0.0
    %263 = vmatpush2.msra.mxu0 0.0
    %264 = vmatprep.subr.mxu0 0.0
    %265 = vmatpush2.msra.mxu0 0.0
    %266 = vmatprep.subr.mxu0 0.0
    %267 = vmatpush2.msra.mxu0 0.0
    %268 = vmatprep.subr.mxu0 0.0
    %269 = vmatpush2.msra.mxu0 0.0
    %270 = vmatprep.subr.mxu0 0.0
    %271 = vmatpush2.msra.mxu0 0.0
    %272 = vmatprep.subr.mxu0 0.0
    %273 = vmatpush2.msra.mxu0 0.0
    %274 = vmatprep.subr.mxu0 0.0
    %275 = vmatpush2.msra.mxu0 0.0
    %276 = vmatprep.subr.mxu0 0.0
    %277 = vmatpush2.msra.mxu0 0.0
    %278 = vmatprep.subr.mxu0 0.0
    %279 = vmatpush2.msra.mxu0 0.0
    %280 = vmatprep.subr.mxu0 0.0
    %281 = vmatpush2.msra.mxu0 0.0
    %282 = vmatprep.mubr.f32.mxu0 0.0
    %v283 = vand.u32 %v54, 4294901760
    %v284 = vsub.f32 %v54, %v283
    %285 = vmatmul.mubr.f32.gmra.mxu0 %v284
    %v286 = vpop.f32.mrf.mxu0
    %v287 = vadd.f32 %v211, %v286
    %v288 = vpop.f32.mrf.mxu0
    %289 = vdwg.mxu0
    %290 = vmatprep.subr.mxu0 0.0
    %291 = vmatpush1.msra.mxu0 0.0
    %292 = vmatprep.subr.mxu0 0.0
    %293 = vmatpush1.msra.mxu0 0.0
    %294 = vmatprep.subr.mxu0 0.0
    %295 = vmatpush1.msra.mxu0 0.0
    %296 = vmatprep.subr.mxu0 0.0
    %297 = vmatpush1.msra.mxu0 0.0
    %298 = vmatprep.subr.mxu0 0.0
    %299 = vmatpush1.msra.mxu0 0.0
    %300 = vmatprep.subr.mxu0 0.0
    %301 = vmatpush1.msra.mxu0 0.0
    %302 = vmatprep.subr.mxu0 0.0
    %303 = vmatpush1.msra.mxu0 0.0
    %304 = vmatprep.subr.mxu0 0.0
    %305 = vmatpush1.msra.mxu0 0.0
    %306 = vmatprep.subr.mxu0 0.0
    %307 = vmatpush1.msra.mxu0 0.0
    %308 = vmatprep.subr.mxu0 0.0
    %309 = vmatpush1.msra.mxu0 0.0
    %310 = vmatprep.subr.mxu0 0.0
    %311 = vmatpush1.msra.mxu0 0.0
    %312 = vmatprep.subr.mxu0 0.0
    %313 = vmatpush1.msra.mxu0 0.0
    %314 = vmatprep.subr.mxu0 0.0
    %315 = vmatpush1.msra.mxu0 0.0
    %316 = vmatprep.subr.mxu0 0.0
    %317 = vmatpush1.msra.mxu0 0.0
    %318 = vmatprep.subr.mxu0 0.0
    %v319 = vand.u32 %v51, 4294901760
    %320 = vmatpush1.msra.mxu0 %v319
    %321 = vmatprep.subr.mxu0 0.0
    %v322 = vand.u32 %v50, 4294901760
    %323 = vmatpush1.msra.mxu0 %v322
    %324 = vmatprep.subr.mxu0 0.0
    %325 = vmatpush2.msra.mxu0 0.0
    %326 = vmatprep.subr.mxu0 0.0
    %327 = vmatpush2.msra.mxu0 0.0
    %328 = vmatprep.subr.mxu0 0.0
    %329 = vmatpush2.msra.mxu0 0.0
    %330 = vmatprep.subr.mxu0 0.0
    %331 = vmatpush2.msra.mxu0 0.0
    %332 = vmatprep.subr.mxu0 0.0
    %333 = vmatpush2.msra.mxu0 0.0
    %334 = vmatprep.subr.mxu0 0.0
    %335 = vmatpush2.msra.mxu0 0.0
    %336 = vmatprep.subr.mxu0 0.0
    %337 = vmatpush2.msra.mxu0 0.0
    %338 = vmatprep.subr.mxu0 0.0
    %339 = vmatpush2.msra.mxu0 0.0
    %340 = vmatprep.subr.mxu0 0.0
    %341 = vmatpush2.msra.mxu0 0.0
    %342 = vmatprep.subr.mxu0 0.0
    %343 = vmatpush2.msra.mxu0 0.0
    %344 = vmatprep.subr.mxu0 0.0
    %345 = vmatpush2.msra.mxu0 0.0
    %346 = vmatprep.subr.mxu0 0.0
    %347 = vmatpush2.msra.mxu0 0.0
    %348 = vmatprep.subr.mxu0 0.0
    %349 = vmatpush2.msra.mxu0 0.0
    %350 = vmatprep.subr.mxu0 0.0
    %351 = vmatpush2.msra.mxu0 0.0
    %352 = vmatprep.subr.mxu0 0.0
    %353 = vmatpush2.msra.mxu0 0.0
    %354 = vmatprep.subr.mxu0 0.0
    %355 = vmatpush2.msra.mxu0 0.0
    %356 = vmatprep.mubr.f32.mxu0 0.0
    %v357 = vand.u32 %v54, 4294901760
    %v358 = vsub.f32 %v54, %v357
    %v359 = vand.u32 %v358, 4294901760
    %360 = vmatmul.mubr.f32.gmra.mxu0 %v359
    %v361 = vpop.f32.mrf.mxu0
    %v362 = vadd.f32 %v287, %v361
    %v363 = vpop.f32.mrf.mxu0
    %364 = vdwg.mxu0
    %365 = vmatprep.subr.mxu0 0.0
    %366 = vmatpush1.msra.mxu0 0.0
    %367 = vmatprep.subr.mxu0 0.0
    %368 = vmatpush1.msra.mxu0 0.0
    %369 = vmatprep.subr.mxu0 0.0
    %370 = vmatpush1.msra.mxu0 0.0
    %371 = vmatprep.subr.mxu0 0.0
    %372 = vmatpush1.msra.mxu0 0.0
    %373 = vmatprep.subr.mxu0 0.0
    %374 = vmatpush1.msra.mxu0 0.0
    %375 = vmatprep.subr.mxu0 0.0
    %376 = vmatpush1.msra.mxu0 0.0
    %377 = vmatprep.subr.mxu0 0.0
    %378 = vmatpush1.msra.mxu0 0.0
    %379 = vmatprep.subr.mxu0 0.0
    %380 = vmatpush1.msra.mxu0 0.0
    %381 = vmatprep.subr.mxu0 0.0
    %382 = vmatpush1.msra.mxu0 0.0
    %383 = vmatprep.subr.mxu0 0.0
    %384 = vmatpush1.msra.mxu0 0.0
    %385 = vmatprep.subr.mxu0 0.0
    %386 = vmatpush1.msra.mxu0 0.0
    %387 = vmatprep.subr.mxu0 0.0
    %388 = vmatpush1.msra.mxu0 0.0
    %389 = vmatprep.subr.mxu0 0.0
    %390 = vmatpush1.msra.mxu0 0.0
    %391 = vmatprep.subr.mxu0 0.0
    %392 = vmatpush1.msra.mxu0 0.0
    %393 = vmatprep.subr.mxu0 0.0
    %v394 = vand.u32 %v51, 4294901760
    %v395 = vsub.f32 %v51, %v394
    %v396 = vand.u32 %v395, 4294901760
    %397 = vmatpush1.msra.mxu0 %v396
    %398 = vmatprep.subr.mxu0 0.0
    %v399 = vand.u32 %v50, 4294901760
    %v400 = vsub.f32 %v50, %v399
    %v401 = vand.u32 %v400, 4294901760
    %402 = vmatpush1.msra.mxu0 %v401
    %403 = vmatprep.subr.mxu0 0.0
    %404 = vmatpush2.msra.mxu0 0.0
    %405 = vmatprep.subr.mxu0 0.0
    %406 = vmatpush2.msra.mxu0 0.0
    %407 = vmatprep.subr.mxu0 0.0
    %408 = vmatpush2.msra.mxu0 0.0
    %409 = vmatprep.subr.mxu0 0.0
    %410 = vmatpush2.msra.mxu0 0.0
    %411 = vmatprep.subr.mxu0 0.0
    %412 = vmatpush2.msra.mxu0 0.0
    %413 = vmatprep.subr.mxu0 0.0
    %414 = vmatpush2.msra.mxu0 0.0
    %415 = vmatprep.subr.mxu0 0.0
    %416 = vmatpush2.msra.mxu0 0.0
    %417 = vmatprep.subr.mxu0 0.0
    %418 = vmatpush2.msra.mxu0 0.0
    %419 = vmatprep.subr.mxu0 0.0
    %420 = vmatpush2.msra.mxu0 0.0
    %421 = vmatprep.subr.mxu0 0.0
    %422 = vmatpush2.msra.mxu0 0.0
    %423 = vmatprep.subr.mxu0 0.0
    %424 = vmatpush2.msra.mxu0 0.0
    %425 = vmatprep.subr.mxu0 0.0
    %426 = vmatpush2.msra.mxu0 0.0
    %427 = vmatprep.subr.mxu0 0.0
    %428 = vmatpush2.msra.mxu0 0.0
    %429 = vmatprep.subr.mxu0 0.0
    %430 = vmatpush2.msra.mxu0 0.0
    %431 = vmatprep.subr.mxu0 0.0
    %432 = vmatpush2.msra.mxu0 0.0
    %433 = vmatprep.subr.mxu0 0.0
    %434 = vmatpush2.msra.mxu0 0.0
    %435 = vmatprep.mubr.f32.mxu0 0.0
    %v436 = vand.u32 %v54, 4294901760
    %437 = vmatmul.mubr.f32.gmra.mxu0 %v436
    %v438 = vpop.f32.mrf.mxu0
    %v439 = vadd.f32 %v362, %v438
    %v440 = vpop.f32.mrf.mxu0
    %441 = vdwg.mxu0
    %442 = vmatprep.subr.mxu0 0.0
    %443 = vmatpush1.msra.mxu0 0.0
    %444 = vmatprep.subr.mxu0 0.0
    %445 = vmatpush1.msra.mxu0 0.0
    %446 = vmatprep.subr.mxu0 0.0
    %447 = vmatpush1.msra.mxu0 0.0
    %448 = vmatprep.subr.mxu0 0.0
    %449 = vmatpush1.msra.mxu0 0.0
    %450 = vmatprep.subr.mxu0 0.0
    %451 = vmatpush1.msra.mxu0 0.0
    %452 = vmatprep.subr.mxu0 0.0
    %453 = vmatpush1.msra.mxu0 0.0
    %454 = vmatprep.subr.mxu0 0.0
    %455 = vmatpush1.msra.mxu0 0.0
    %456 = vmatprep.subr.mxu0 0.0
    %457 = vmatpush1.msra.mxu0 0.0
    %458 = vmatprep.subr.mxu0 0.0
    %459 = vmatpush1.msra.mxu0 0.0
    %460 = vmatprep.subr.mxu0 0.0
    %461 = vmatpush1.msra.mxu0 0.0
    %462 = vmatprep.subr.mxu0 0.0
    %463 = vmatpush1.msra.mxu0 0.0
    %464 = vmatprep.subr.mxu0 0.0
    %465 = vmatpush1.msra.mxu0 0.0
    %466 = vmatprep.subr.mxu0 0.0
    %467 = vmatpush1.msra.mxu0 0.0
    %468 = vmatprep.subr.mxu0 0.0
    %469 = vmatpush1.msra.mxu0 0.0
    %470 = vmatprep.subr.mxu0 0.0
    %v471 = vand.u32 %v51, 4294901760
    %472 = vmatpush1.msra.mxu0 %v471
    %473 = vmatprep.subr.mxu0 0.0
    %v474 = vand.u32 %v50, 4294901760
    %475 = vmatpush1.msra.mxu0 %v474
    %476 = vmatprep.subr.mxu0 0.0
    %477 = vmatpush2.msra.mxu0 0.0
    %478 = vmatprep.subr.mxu0 0.0
    %479 = vmatpush2.msra.mxu0 0.0
    %480 = vmatprep.subr.mxu0 0.0
    %481 = vmatpush2.msra.mxu0 0.0
    %482 = vmatprep.subr.mxu0 0.0
    %483 = vmatpush2.msra.mxu0 0.0
    %484 = vmatprep.subr.mxu0 0.0
    %485 = vmatpush2.msra.mxu0 0.0
    %486 = vmatprep.subr.mxu0 0.0
    %487 = vmatpush2.msra.mxu0 0.0
    %488 = vmatprep.subr.mxu0 0.0
    %489 = vmatpush2.msra.mxu0 0.0
    %490 = vmatprep.subr.mxu0 0.0
    %491 = vmatpush2.msra.mxu0 0.0
    %492 = vmatprep.subr.mxu0 0.0
    %493 = vmatpush2.msra.mxu0 0.0
    %494 = vmatprep.subr.mxu0 0.0
    %495 = vmatpush2.msra.mxu0 0.0
    %496 = vmatprep.subr.mxu0 0.0
    %497 = vmatpush2.msra.mxu0 0.0
    %498 = vmatprep.subr.mxu0 0.0
    %499 = vmatpush2.msra.mxu0 0.0
    %500 = vmatprep.subr.mxu0 0.0
    %501 = vmatpush2.msra.mxu0 0.0
    %502 = vmatprep.subr.mxu0 0.0
    %503 = vmatpush2.msra.mxu0 0.0
    %504 = vmatprep.subr.mxu0 0.0
    %505 = vmatpush2.msra.mxu0 0.0
    %506 = vmatprep.subr.mxu0 0.0
    %507 = vmatpush2.msra.mxu0 0.0
    %508 = vmatprep.mubr.f32.mxu0 0.0
    %v509 = vand.u32 %v54, 4294901760
    %510 = vmatmul.mubr.f32.gmra.mxu0 %v509
    %v511 = vpop.f32.mrf.mxu0
    %v512 = vadd.f32 %v439, %v511
    %v513 = vpop.f32.mrf.mxu0
    %514 = vdwg.mxu0
    %v515 = vld [vmem:[#allocation9] sm:$0xff]
    %v516 = vadd.f32 %v515, %v512
    %517 = vst [vmem:[#allocation9] sm:$0xff] %v516
    // Predicated region
    $region22: #{tpu_custom_call.1} parent=1 // pred_check
      _
    $region23: #{tpu_custom_call.1} parent=1 // pred_check_branch
      %519 = sbr.rel (0) target = $region25
    $region24: #{tpu_custom_call.1} parent=1 // pred_region
      %s521 = ssub.s32 128, 128
      %522 = vsyncadd [#allocation6], %s521
      %s524 = sshll.u32 [#allocation9], 4
      %s525 = int_to_ptr.vmem [resolvable:$true] %s524
      %527 = dma.vmem_to_hbm [thread:$0]  %s525, 128, %s3, [#allocation6]
    $region25: #{tpu_custom_call.1} parent=1 // pred_fallthru
      _
    // Predicated region
    $region26: #{tpu_custom_call.1} parent=1 // pred_check
      _
    $region27: #{tpu_custom_call.1} parent=1 // pred_check_branch
      %529 = sbr.rel (0) target = $region29
    $region28: #{tpu_custom_call.1} parent=1 // pred_region
      %530 = dma.done [#allocation6], 128
    $region29: #{tpu_custom_call.1} parent=1 // pred_fallthru
      _
    %531 = vsyncpa [#allocation5], 1
    %532 = vsyncpa [#allocation8], 1
    %533 = vsyncpa [#allocation6], 1

</llo_original>
